<compile_context>
chip_gen: v6e
topology: v6e:2x2x1
jax: 0.10.0
libtpu: 0.0.40
codegen_flags: <defaults>
</compile_context>

<pallas_src>
import functools

import numpy as np
import jax
import jax.numpy as jnp
from jax.experimental import pallas as pl
from jax.experimental.pallas import tpu as pltpu


def _round_up(n: int, m: int) -> int:
    return ((n + m - 1) // m) * m


def _vmem_capacity_bytes() -> int:
    """Per-core VMEM capacity, with a conservative fallback (v7x = 64 MiB)."""
    try:
        return int(pltpu.get_tpu_info().vmem_capacity_bytes)
    except Exception:
        return 64 * 1024 * 1024


def _fused_mlp_kernel(*refs, num_layers: int, compute_dtype):
    # refs = (x_ref, w0, b0, w1, b1, ..., w_{L-1}, b_{L-1}, o_ref)
    x_ref = refs[0]
    o_ref = refs[-1]
    wb_refs = refs[1:-1]

    # Activations stay f32 end-to-end; only the dot operands are cast.
    h = x_ref[...].astype(jnp.float32)
    for i in range(num_layers):
        w = wb_refs[2 * i][...]                    # already compute_dtype in HBM
        b = wb_refs[2 * i + 1][...]                # (1, D_out) f32
        acc = jnp.dot(h.astype(compute_dtype), w,
                      preferred_element_type=jnp.float32) + b
        if i != num_layers - 1:
            h = jnp.maximum(acc, 0.0)              # f32 VPU (v5e-safe)
        else:
            o_ref[...] = acc.astype(o_ref.dtype)


def init_params(key, p_dims):
    """Deterministic init matching torch.nn.Linear shapes.

    Weight stored as (d_in, d_out) (transpose of PyTorch's (d_out, d_in)),
    bias as (d_out,).
    """
    params = []
    for d_in, d_out in zip(p_dims[:-1], p_dims[1:]):
        key, kw, kb = jax.random.split(key, 3)
        bound = 1.0 / (d_in ** 0.5)  # torch.nn.Linear default uniform bound
        w = jax.random.uniform(kw, (d_in, d_out), jnp.float32, -bound, bound)
        b = jax.random.uniform(kb, (d_out,), jnp.float32, -bound, bound)
        params.append((w, b))
    return params


def pad_params(params, weight_dtype=jnp.bfloat16):
    """Zero-pad feature dims to multiples of 128 and pre-cast weights.

    Weights are cast to `weight_dtype` (the matmul operand dtype) so the
    kernel DMAs half the bytes and does no per-step casts.  Biases stay f32
    (they are added to the f32 accumulator).
    """
    padded = []
    for w, b in params:
        d_in, d_out = w.shape
        d_in_p, d_out_p = _round_up(d_in, 128), _round_up(d_out, 128)
        w_p = jnp.zeros((d_in_p, d_out_p), weight_dtype).at[:d_in, :d_out].set(
            w.astype(weight_dtype))
        b_p = jnp.zeros((1, d_out_p), jnp.float32).at[0, :d_out].set(
            b.astype(jnp.float32))
        padded.append((w_p, b_p))
    return padded


def encoder_decoder_forward(x, params, padded_params=None, *,
                            compute_dtype=jnp.bfloat16):
    """Fused forward pass: Linear -> ReLU for all layers except the last."""
    B, d_in0 = x.shape
    num_layers = len(params)
    d_out_last = params[-1][0].shape[1]

    if padded_params is None:
        padded_params = pad_params(params, weight_dtype=compute_dtype)

    # Consistency check (trace-time): padded params must match params + dtype.
    assert len(padded_params) == num_layers, "params/padded_params length drift"
    for (w, b), (w_p, b_p) in zip(params, padded_params):
        assert w_p.shape == (_round_up(w.shape[0], 128),
                             _round_up(w.shape[1], 128)), "padded weight shape drift"
        assert b_p.shape == (1, _round_up(b.shape[0], 128)), "padded bias shape drift"
        assert w_p.dtype == np.dtype(compute_dtype), "padded weight dtype != compute_dtype"
        assert b_p.dtype == np.dtype(jnp.float32), "padded bias must stay f32"

    d_in0_p = padded_params[0][0].shape[0]
    d_out_last_p = padded_params[-1][0].shape[1]

    # --- VMEM accounting ---------------------------------------------------
    # Weight/bias blocks are grid-invariant; budget for worst-case double
    # buffering by the pipeline.  Activation tiles scale with tm.
    weight_bytes = sum(int(w_p.size) * w_p.dtype.itemsize +
                       int(b_p.size) * b_p.dtype.itemsize
                       for w_p, b_p in padded_params)
    widths_p = [d_in0_p] + [w_p.shape[1] for w_p, _ in padded_params]
    max_width_p = max(widths_p)
    itemsize_x = x.dtype.itemsize
    row_bytes = (2 * (d_in0_p + d_out_last_p) * itemsize_x   # dbl-buffered x/out tiles
                 + 3 * 4 * max_width_p)                      # live f32 intermediates

    vmem_cap = _vmem_capacity_bytes()
    vmem_budget = int(vmem_cap * 0.75)

    # Batch tile: largest aligned tile that fits the remaining VMEM budget
    # (fewer, fatter grid steps amortize the ~0.35us/step pipeline overhead).
    if B >= 128:
        tm = 128
        for cand in (512, 256):
            if cand <= B and 2 * weight_bytes + cand * row_bytes <= vmem_budget:
                tm = cand
                break
    else:
        tm = _round_up(max(B, 1), 8)

    vmem_limit = int(min(max(2 * weight_bytes + tm * row_bytes + (4 << 20),
                             32 << 20),
                         int(vmem_cap * 0.9)))

    # --- Input staging -------------------------------------------------------
    # Feature-dim padding of x is kept (lane-dense K); batch is NOT padded for
    # large B — the ragged last block is masked by Pallas on writeback.
    if B < tm:
        # Tiny, non-sublane-aligned batch: pad up to one tile (negligible).
        x_in = jnp.zeros((tm, d_in0_p), x.dtype).at[:B, :d_in0].set(x)
        rows_out = tm
    else:
        x_in = x if d_in0 == d_in0_p else jnp.pad(
            x, ((0, 0), (0, d_in0_p - d_in0)))
        rows_out = B
    grid = (pl.cdiv(rows_out, tm),)

    in_specs = [pl.BlockSpec((tm, d_in0_p), lambda i: (i, 0))]
    flat_wb = []
    for w_p, b_p in padded_params:
        # Grid-invariant full-array blocks (index_map constant => no re-DMA).
        in_specs.append(pl.BlockSpec(w_p.shape, lambda i: (0, 0)))
        in_specs.append(pl.BlockSpec(b_p.shape, lambda i: (0, 0)))
        flat_wb += [w_p, b_p]

    kernel = functools.partial(
        _fused_mlp_kernel, num_layers=num_layers, compute_dtype=compute_dtype)

    out = pl.pallas_call(
        kernel,
        out_shape=jax.ShapeDtypeStruct((rows_out, d_out_last_p), x.dtype),
        grid=grid,
        in_specs=in_specs,
        out_specs=pl.BlockSpec((tm, d_out_last_p), lambda i: (i, 0)),
        compiler_params=pltpu.CompilerParams(
            dimension_semantics=("parallel",),
            vmem_limit_bytes=vmem_limit,
        ),
    )(x_in, *flat_wb)

    return out[:B, :d_out_last]


def encoder_decoder_ref(x, params):
    """Pure-JAX f32 reference for validation."""
    h = x
    n = len(params)
    for i, (w, b) in enumerate(params):
        h = h @ w + b
        if i != n - 1:
            h = jnp.maximum(h, 0.0)
    return h


if __name__ == "__main__":
    key = jax.random.PRNGKey(0)
    p_dims = [32, 64, 48, 16]  # encoder/decoder layer widths
    batch = 8

    key, kx = jax.random.split(key)
    x = jax.random.normal(kx, (batch, p_dims[0]), jnp.float32)
    params = init_params(key, p_dims)

    ref = encoder_decoder_ref(x, params)

    # f32 compute path: tight check of kernel structure / padding semantics.
    padded_f32 = pad_params(params, weight_dtype=jnp.float32)
    fwd_f32 = jax.jit(functools.partial(
        encoder_decoder_forward, compute_dtype=jnp.float32))
    out_f32 = jax.block_until_ready(fwd_f32(x, params, padded_f32))
    assert out_f32.shape == (batch, p_dims[-1])
    assert jnp.allclose(out_f32, ref, atol=1e-4, rtol=1e-4), "f32 mismatch vs reference"

    # Default bf16 matmul-operand path: weights pre-cast in HBM; accumulation,
    # bias, ReLU and inter-layer activations remain f32.
    padded_bf16 = pad_params(params, weight_dtype=jnp.bfloat16)
    fwd_bf16 = jax.jit(encoder_decoder_forward)
    out_bf16 = jax.block_until_ready(fwd_bf16(x, params, padded_bf16))
    assert out_bf16.shape == (batch, p_dims[-1])
    assert jnp.allclose(out_bf16, ref, atol=5e-2, rtol=5e-2), "bf16 mismatch vs reference"

    # Ragged-batch path (B not a multiple of tm): no host-side batch padding,
    # last block masked by Pallas on writeback.
    key, kx2 = jax.random.split(key)
    x_big = jax.random.normal(kx2, (200, p_dims[0]), jnp.float32)
    out_big = jax.block_until_ready(fwd_f32(x_big, params, padded_f32))
    ref_big = encoder_decoder_ref(x_big, params)
    assert out_big.shape == (200, p_dims[-1])
    assert jnp.allclose(out_big, ref_big, atol=1e-4, rtol=1e-4), "ragged-batch mismatch"

    print("KERNEL_OK")
</pallas_src>

<mosaic_0001>
module attributes {stable_mosaic.version = 11 : i64} {
  func.func @_fused_mlp_kernel(%arg0: i32, %arg1: memref<8x128xf32, #tpu.memory_space<vmem>>, %arg2: memref<128x128xf32, #tpu.memory_space<vmem>>, %arg3: memref<1x128xf32, #tpu.memory_space<vmem>>, %arg4: memref<128x128xf32, #tpu.memory_space<vmem>>, %arg5: memref<1x128xf32, #tpu.memory_space<vmem>>, %arg6: memref<128x128xf32, #tpu.memory_space<vmem>>, %arg7: memref<1x128xf32, #tpu.memory_space<vmem>>, %arg8: memref<8x128xf32, #tpu.memory_space<vmem>>) attributes {dimension_semantics = [#tpu.dimension_semantics<parallel>], iteration_bounds = array<i64: 1>, scalar_prefetch = 0 : i64, scratch_operands = 0 : i64, tpu.core_type = #tpu.core_type<tc>, window_params = [{transform_indices = @transform_0, window_bounds = array<i64: 8, 128>}, {pipeline_mode = #tpu.pipeline_mode<synchronous>, transform_indices = @transform_1, window_bounds = array<i64: 128, 128>}, {pipeline_mode = #tpu.pipeline_mode<synchronous>, transform_indices = @transform_2, window_bounds = array<i64: 1, 128>}, {pipeline_mode = #tpu.pipeline_mode<synchronous>, transform_indices = @transform_3, window_bounds = array<i64: 128, 128>}, {pipeline_mode = #tpu.pipeline_mode<synchronous>, transform_indices = @transform_4, window_bounds = array<i64: 1, 128>}, {pipeline_mode = #tpu.pipeline_mode<synchronous>, transform_indices = @transform_5, window_bounds = array<i64: 128, 128>}, {pipeline_mode = #tpu.pipeline_mode<synchronous>, transform_indices = @transform_6, window_bounds = array<i64: 1, 128>}, {transform_indices = @transform_7, window_bounds = array<i64: 8, 128>}]} {
    %c0 = arith.constant 0 : index
    %c0_0 = arith.constant 0 : index
    %0 = vector.load %arg1[%c0, %c0_0] : memref<8x128xf32, #tpu.memory_space<vmem>>, vector<8x128xf32>
    %c0_1 = arith.constant 0 : index
    %c0_2 = arith.constant 0 : index
    %1 = vector.load %arg2[%c0_1, %c0_2] : memref<128x128xf32, #tpu.memory_space<vmem>>, vector<128x128xf32>
    %c0_3 = arith.constant 0 : index
    %c0_4 = arith.constant 0 : index
    %2 = vector.load %arg3[%c0_3, %c0_4] : memref<1x128xf32, #tpu.memory_space<vmem>>, vector<1x128xf32>
    %cst = arith.constant dense<0.000000e+00> : vector<8x128xf32>
    %3 = tpu.matmul %0, %1, %cst {dimension_numbers = #tpu.dot_dimension_numbers<[1], [0], [0], [1], [0, 0, 1, 1], [], []>} : vector<8x128xf32>, vector<128x128xf32>, vector<8x128xf32> -> vector<8x128xf32>
    %4 = vector.broadcast %2 : vector<1x128xf32> to vector<8x128xf32>
    %5 = arith.addf %3, %4 : vector<8x128xf32>
    %cst_5 = arith.constant 0.000000e+00 : f32
    %6 = vector.broadcast %cst_5 : f32 to vector<8x128xf32>
    %7 = arith.maximumf %5, %6 : vector<8x128xf32>
    %c0_6 = arith.constant 0 : index
    %c0_7 = arith.constant 0 : index
    %8 = vector.load %arg4[%c0_6, %c0_7] : memref<128x128xf32, #tpu.memory_space<vmem>>, vector<128x128xf32>
    %c0_8 = arith.constant 0 : index
    %c0_9 = arith.constant 0 : index
    %9 = vector.load %arg5[%c0_8, %c0_9] : memref<1x128xf32, #tpu.memory_space<vmem>>, vector<1x128xf32>
    %cst_10 = arith.constant dense<0.000000e+00> : vector<8x128xf32>
    %10 = tpu.matmul %7, %8, %cst_10 {dimension_numbers = #tpu.dot_dimension_numbers<[1], [0], [0], [1], [0, 0, 1, 1], [], []>} : vector<8x128xf32>, vector<128x128xf32>, vector<8x128xf32> -> vector<8x128xf32>
    %11 = vector.broadcast %9 : vector<1x128xf32> to vector<8x128xf32>
    %12 = arith.addf %10, %11 : vector<8x128xf32>
    %cst_11 = arith.constant 0.000000e+00 : f32
    %13 = vector.broadcast %cst_11 : f32 to vector<8x128xf32>
    %14 = arith.maximumf %12, %13 : vector<8x128xf32>
    %c0_12 = arith.constant 0 : index
    %c0_13 = arith.constant 0 : index
    %15 = vector.load %arg6[%c0_12, %c0_13] : memref<128x128xf32, #tpu.memory_space<vmem>>, vector<128x128xf32>
    %c0_14 = arith.constant 0 : index
    %c0_15 = arith.constant 0 : index
    %16 = vector.load %arg7[%c0_14, %c0_15] : memref<1x128xf32, #tpu.memory_space<vmem>>, vector<1x128xf32>
    %cst_16 = arith.constant dense<0.000000e+00> : vector<8x128xf32>
    %17 = tpu.matmul %14, %15, %cst_16 {dimension_numbers = #tpu.dot_dimension_numbers<[1], [0], [0], [1], [0, 0, 1, 1], [], []>} : vector<8x128xf32>, vector<128x128xf32>, vector<8x128xf32> -> vector<8x128xf32>
    %18 = vector.broadcast %16 : vector<1x128xf32> to vector<8x128xf32>
    %19 = arith.addf %17, %18 : vector<8x128xf32>
    %c0_17 = arith.constant 0 : index
    %c0_18 = arith.constant 0 : index
    %20 = vector.load %arg8[%c0_17, %c0_18] : memref<8x128xf32, #tpu.memory_space<vmem>>, vector<8x128xf32>
    tpu.vector_store %arg8[%c0_17, %c0_18], %19 {strides = array<i32>} : memref<8x128xf32, #tpu.memory_space<vmem>>, vector<8x128xf32>,
    return
  }
  func.func @transform_0(%arg0: i32) -> (i32, i32) {
    %c0_i32 = arith.constant 0 : i32
    %c0_i32_0 = arith.constant 0 : i32
    return %arg0, %c0_i32 : i32, i32
  }
  func.func @transform_1(%arg0: i32) -> (i32, i32) {
    %c0_i32 = arith.constant 0 : i32
    %c0_i32_0 = arith.constant 0 : i32
    %c0_i32_1 = arith.constant 0 : i32
    return %c0_i32, %c0_i32_0 : i32, i32
  }
  func.func @transform_2(%arg0: i32) -> (i32, i32) {
    %c0_i32 = arith.constant 0 : i32
    %c0_i32_0 = arith.constant 0 : i32
    %c0_i32_1 = arith.constant 0 : i32
    return %c0_i32, %c0_i32_0 : i32, i32
  }
  func.func @transform_3(%arg0: i32) -> (i32, i32) {
    %c0_i32 = arith.constant 0 : i32
    %c0_i32_0 = arith.constant 0 : i32
    %c0_i32_1 = arith.constant 0 : i32
    return %c0_i32, %c0_i32_0 : i32, i32
  }
  func.func @transform_4(%arg0: i32) -> (i32, i32) {
    %c0_i32 = arith.constant 0 : i32
    %c0_i32_0 = arith.constant 0 : i32
    %c0_i32_1 = arith.constant 0 : i32
    return %c0_i32, %c0_i32_0 : i32, i32
  }
  func.func @transform_5(%arg0: i32) -> (i32, i32) {
    %c0_i32 = arith.constant 0 : i32
    %c0_i32_0 = arith.constant 0 : i32
    %c0_i32_1 = arith.constant 0 : i32
    return %c0_i32, %c0_i32_0 : i32, i32
  }
  func.func @transform_6(%arg0: i32) -> (i32, i32) {
    %c0_i32 = arith.constant 0 : i32
    %c0_i32_0 = arith.constant 0 : i32
    %c0_i32_1 = arith.constant 0 : i32
    return %c0_i32, %c0_i32_0 : i32, i32
  }
  func.func @transform_7(%arg0: i32) -> (i32, i32) {
    %c0_i32 = arith.constant 0 : i32
    %c0_i32_0 = arith.constant 0 : i32
    return %arg0, %c0_i32 : i32, i32
  }
}

</mosaic_0001>

<llo_original>
// kernel: encoder_decoder_forward.1
$region0: #{encoder_decoder_forward.1}
  #allocation0 [shape = 'u32[]', space=smem, size = 0x4, offset = 0x4, fixed_abs, tag = 'smem constant byte address 0x4 - core index']
  #allocation1 [shape = 'u32[144,128]{1,0:T(1,128)}', space=vmem, size = 0x12000, scoped, tag = 'internal scratch']
  %s0 = inlined_call_operand.vmem [shape: f32[8,128], index: 0, kind: input, shape index: {}]
  %s1 = inlined_call_operand.hbm [shape: f32[128,128], index: 1, kind: input, shape index: {}]
  %s2 = inlined_call_operand.vmem [shape: f32[1,128], index: 2, kind: input, shape index: {}]
  %s3 = inlined_call_operand.hbm [shape: f32[128,128], index: 3, kind: input, shape index: {}]
  %s4 = inlined_call_operand.vmem [shape: f32[1,128], index: 4, kind: input, shape index: {}]
  %s5 = inlined_call_operand.hbm [shape: f32[128,128], index: 5, kind: input, shape index: {}]
  %s6 = inlined_call_operand.vmem [shape: f32[1,128], index: 6, kind: input, shape index: {}]
  %s7 = inlined_call_operand.hbm [shape: f32[8,128], index: 7, kind: output, shape index: {}]
  %s8 = sld [smem:[#allocation0]]
  $region50: #{encoder_decoder_forward.1} parent=0
    _
  %s10 = ssub.s32 1, %s8
  %s11 = scalar_select 0, %s10, %s8
  $region1: #{encoder_decoder_forward.1} parent=0
    #allocation2 [shape = 'u8[65536]{0}', space=vmem, size = 0x10000, scoped, tag = 'input window, operand 1, single buffered']
    #allocation3 [shape = 's32[1]{0}', space=sflag, size = 0x4, scoped, tag = 'scoped memory for encoder_decoder_forward.1']
    #allocation4 [shape = 's32[1]{0}', space=sflag, size = 0x4, scoped, tag = 'scoped memory for encoder_decoder_forward.1']
    #allocation5 [shape = 'u8[65536]{0}', space=vmem, size = 0x10000, scoped, tag = 'input window, operand 3, single buffered']
    #allocation6 [shape = 's32[1]{0}', space=sflag, size = 0x4, scoped, tag = 'scoped memory for encoder_decoder_forward.1']
    #allocation7 [shape = 'u8[65536]{0}', space=vmem, size = 0x10000, scoped, tag = 'input window, operand 5, single buffered']
    #allocation8 [shape = 'u8[4096]{0}', space=vmem, size = 0x1000, scoped, tag = 'output window, operand 0, single buffered']
    %12 = vsyncpa [#allocation3], 0
    %13 = vsyncpa [#allocation6], 0
    %14 = vsyncpa [#allocation4], 0
    // Predicated region
    $region2: #{encoder_decoder_forward.1} parent=1 // pred_check
      _
    $region3: #{encoder_decoder_forward.1} parent=1 // pred_check_branch
      %16 = sbr.rel (0) target = $region5
    $region4: #{encoder_decoder_forward.1} parent=1 // pred_region
      _
    $region5: #{encoder_decoder_forward.1} parent=1 // pred_fallthru
      _
    // Predicated region
    $region6: #{encoder_decoder_forward.1} parent=1 // pred_check
      _
    $region7: #{encoder_decoder_forward.1} parent=1 // pred_check_branch
      %18 = sbr.rel (0) target = $region9
    $region8: #{encoder_decoder_forward.1} parent=1 // pred_region
      %s20 = ssub.s32 2048, 2048
      %21 = vsyncadd [#allocation3], %s20
      %s22 = sshll.u32 [#allocation2], 4
      %s23 = int_to_ptr.vmem [resolvable:$true] %s22
      %28 = dma.hbm_to_vmem [thread:$0]  %s1, 2048, %s23, [#allocation3], 128, 128, 8
    $region9: #{encoder_decoder_forward.1} parent=1 // pred_fallthru
      _
    // Predicated region
    $region10: #{encoder_decoder_forward.1} parent=1 // pred_check
      _
    $region11: #{encoder_decoder_forward.1} parent=1 // pred_check_branch
      %30 = sbr.rel (0) target = $region13
    $region12: #{encoder_decoder_forward.1} parent=1 // pred_region
      _
    $region13: #{encoder_decoder_forward.1} parent=1 // pred_fallthru
      _
    // Predicated region
    $region14: #{encoder_decoder_forward.1} parent=1 // pred_check
      _
    $region15: #{encoder_decoder_forward.1} parent=1 // pred_check_branch
      %32 = sbr.rel (0) target = $region17
    $region16: #{encoder_decoder_forward.1} parent=1 // pred_region
      %s34 = ssub.s32 2048, 2048
      %35 = vsyncadd [#allocation6], %s34
      %s36 = sshll.u32 [#allocation5], 4
      %s37 = int_to_ptr.vmem [resolvable:$true] %s36
      %42 = dma.hbm_to_vmem [thread:$0]  %s3, 2048, %s37, [#allocation6], 128, 128, 8
    $region17: #{encoder_decoder_forward.1} parent=1 // pred_fallthru
      _
    // Predicated region
    $region18: #{encoder_decoder_forward.1} parent=1 // pred_check
      _
    $region19: #{encoder_decoder_forward.1} parent=1 // pred_check_branch
      %44 = sbr.rel (0) target = $region21
    $region20: #{encoder_decoder_forward.1} parent=1 // pred_region
      _
    $region21: #{encoder_decoder_forward.1} parent=1 // pred_fallthru
      _
    // Predicated region
    $region22: #{encoder_decoder_forward.1} parent=1 // pred_check
      _
    $region23: #{encoder_decoder_forward.1} parent=1 // pred_check_branch
      %46 = sbr.rel (0) target = $region25
    $region24: #{encoder_decoder_forward.1} parent=1 // pred_region
      %s48 = ssub.s32 2048, 2048
      %49 = vsyncadd [#allocation6], %s48
      %s50 = sshll.u32 [#allocation7], 4
      %s51 = int_to_ptr.vmem [resolvable:$true] %s50
      %56 = dma.hbm_to_vmem [thread:$0]  %s5, 2048, %s51, [#allocation6], 128, 128, 8
    $region25: #{encoder_decoder_forward.1} parent=1 // pred_fallthru
      _
    // Predicated region
    $region26: #{encoder_decoder_forward.1} parent=1 // pred_check
      _
    $region27: #{encoder_decoder_forward.1} parent=1 // pred_check_branch
      %58 = sbr.rel (0) target = $region29
    $region28: #{encoder_decoder_forward.1} parent=1 // pred_region
      _
    $region29: #{encoder_decoder_forward.1} parent=1 // pred_fallthru
      _
    // Predicated region
    $region30: #{encoder_decoder_forward.1} parent=1 // pred_check
      _
    $region31: #{encoder_decoder_forward.1} parent=1 // pred_check_branch
      %60 = sbr.rel (0) target = $region33
    $region32: #{encoder_decoder_forward.1} parent=1 // pred_region
      %61 = dma.done [#allocation3], 2048
    $region33: #{encoder_decoder_forward.1} parent=1 // pred_fallthru
      _
    // Predicated region
    $region34: #{encoder_decoder_forward.1} parent=1 // pred_check
      _
    $region35: #{encoder_decoder_forward.1} parent=1 // pred_check_branch
      %63 = sbr.rel (0) target = $region37
    $region36: #{encoder_decoder_forward.1} parent=1 // pred_region
      %64 = dma.done [#allocation6], 2048
    $region37: #{encoder_decoder_forward.1} parent=1 // pred_fallthru
      _
    // Predicated region
    $region38: #{encoder_decoder_forward.1} parent=1 // pred_check
      _
    $region39: #{encoder_decoder_forward.1} parent=1 // pred_check_branch
      %66 = sbr.rel (0) target = $region41
    $region40: #{encoder_decoder_forward.1} parent=1 // pred_region
      %67 = dma.done [#allocation6], 2048
    $region41: #{encoder_decoder_forward.1} parent=1 // pred_fallthru
      _
    %v68 = vld [vmem:[%s0] sm:$0xff]
    %v69 = vld [vmem:[#allocation2] sm:$0xff]
    %v70 = vld [vmem:[#allocation2 + $0x8] sm:$0xff]
    %v71 = vld [vmem:[#allocation2 + $0x10] sm:$0xff]
    %v72 = vld [vmem:[#allocation2 + $0x18] sm:$0xff]
    %v73 = vld [vmem:[#allocation2 + $0x20] sm:$0xff]
    %v74 = vld [vmem:[#allocation2 + $0x28] sm:$0xff]
    %v75 = vld [vmem:[#allocation2 + $0x30] sm:$0xff]
    %v76 = vld [vmem:[#allocation2 + $0x38] sm:$0xff]
    %v77 = vld [vmem:[#allocation2 + $0x40] sm:$0xff]
    %v78 = vld [vmem:[#allocation2 + $0x48] sm:$0xff]
    %v79 = vld [vmem:[#allocation2 + $0x50] sm:$0xff]
    %v80 = vld [vmem:[#allocation2 + $0x58] sm:$0xff]
    %v81 = vld [vmem:[#allocation2 + $0x60] sm:$0xff]
    %v82 = vld [vmem:[#allocation2 + $0x68] sm:$0xff]
    %v83 = vld [vmem:[#allocation2 + $0x70] sm:$0xff]
    %v84 = vld [vmem:[#allocation2 + $0x78] sm:$0xff]
    %v85 = vld [vmem:[%s2] sm:$0x1]
    %v87 = vlaneseq
    %v88 = vshrl.u32 %v87, 7
    %v89 = vsub.s32 0, %v88
    %v90 = vrot.slane %v85, %v89
    %92 = vmatprep.subr.mxu0 0.0
    %93 = vmatpush1.msra.mxu0 %v84
    %94 = vmatprep.subr.mxu0 0.0
    %95 = vmatpush1.msra.mxu0 %v83
    %96 = vmatprep.subr.mxu0 0.0
    %97 = vmatpush1.msra.mxu0 %v82
    %98 = vmatprep.subr.mxu0 0.0
    %99 = vmatpush1.msra.mxu0 %v81
    %100 = vmatprep.subr.mxu0 0.0
    %101 = vmatpush1.msra.mxu0 %v80
    %102 = vmatprep.subr.mxu0 0.0
    %103 = vmatpush1.msra.mxu0 %v79
    %104 = vmatprep.subr.mxu0 0.0
    %105 = vmatpush1.msra.mxu0 %v78
    %106 = vmatprep.subr.mxu0 0.0
    %107 = vmatpush1.msra.mxu0 %v77
    %108 = vmatprep.subr.mxu0 0.0
    %109 = vmatpush1.msra.mxu0 %v76
    %110 = vmatprep.subr.mxu0 0.0
    %111 = vmatpush1.msra.mxu0 %v75
    %112 = vmatprep.subr.mxu0 0.0
    %113 = vmatpush1.msra.mxu0 %v74
    %114 = vmatprep.subr.mxu0 0.0
    %115 = vmatpush1.msra.mxu0 %v73
    %116 = vmatprep.subr.mxu0 0.0
    %117 = vmatpush1.msra.mxu0 %v72
    %118 = vmatprep.subr.mxu0 0.0
    %119 = vmatpush1.msra.mxu0 %v71
    %120 = vmatprep.subr.mxu0 0.0
    %121 = vmatpush1.msra.mxu0 %v70
    %122 = vmatprep.subr.mxu0 0.0
    %123 = vmatpush1.msra.mxu0 %v69
    %124 = vmatprep.subr.mxu0 0.0
    %125 = vmatpush2.msra.mxu0 0.0
    %126 = vmatprep.subr.mxu0 0.0
    %127 = vmatpush2.msra.mxu0 0.0
    %128 = vmatprep.subr.mxu0 0.0
    %129 = vmatpush2.msra.mxu0 0.0
    %130 = vmatprep.subr.mxu0 0.0
    %131 = vmatpush2.msra.mxu0 0.0
    %132 = vmatprep.subr.mxu0 0.0
    %133 = vmatpush2.msra.mxu0 0.0
    %134 = vmatprep.subr.mxu0 0.0
    %135 = vmatpush2.msra.mxu0 0.0
    %136 = vmatprep.subr.mxu0 0.0
    %137 = vmatpush2.msra.mxu0 0.0
    %138 = vmatprep.subr.mxu0 0.0
    %139 = vmatpush2.msra.mxu0 0.0
    %140 = vmatprep.subr.mxu0 0.0
    %141 = vmatpush2.msra.mxu0 0.0
    %142 = vmatprep.subr.mxu0 0.0
    %143 = vmatpush2.msra.mxu0 0.0
    %144 = vmatprep.subr.mxu0 0.0
    %145 = vmatpush2.msra.mxu0 0.0
    %146 = vmatprep.subr.mxu0 0.0
    %147 = vmatpush2.msra.mxu0 0.0
    %148 = vmatprep.subr.mxu0 0.0
    %149 = vmatpush2.msra.mxu0 0.0
    %150 = vmatprep.subr.mxu0 0.0
    %151 = vmatpush2.msra.mxu0 0.0
    %152 = vmatprep.subr.mxu0 0.0
    %153 = vmatpush2.msra.mxu0 0.0
    %154 = vmatprep.subr.mxu0 0.0
    %155 = vmatpush2.msra.mxu0 0.0
    %156 = vmatprep.mubr.f32.mxu0 0.0
    %157 = vmatmul.mubr.f32.gmra.mxu0 %v68
    %v158 = vpop.f32.mrf.mxu0
    %v159 = vadd.f32 %v90, %v158
    %v160 = vpop.f32.mrf.mxu0
    %161 = vdwg.mxu0
    %v162 = vmax.f32 %v159, 0.0
    %v163 = vld [vmem:[#allocation5] sm:$0xff]
    %v164 = vld [vmem:[#allocation5 + $0x8] sm:$0xff]
    %v165 = vld [vmem:[#allocation5 + $0x10] sm:$0xff]
    %v166 = vld [vmem:[#allocation5 + $0x18] sm:$0xff]
    %v167 = vld [vmem:[#allocation5 + $0x20] sm:$0xff]
    %v168 = vld [vmem:[#allocation5 + $0x28] sm:$0xff]
    %v169 = vld [vmem:[#allocation5 + $0x30] sm:$0xff]
    %v170 = vld [vmem:[#allocation5 + $0x38] sm:$0xff]
    %v171 = vld [vmem:[#allocation5 + $0x40] sm:$0xff]
    %v172 = vld [vmem:[#allocation5 + $0x48] sm:$0xff]
    %v173 = vld [vmem:[#allocation5 + $0x50] sm:$0xff]
    %v174 = vld [vmem:[#allocation5 + $0x58] sm:$0xff]
    %v175 = vld [vmem:[#allocation5 + $0x60] sm:$0xff]
    %v176 = vld [vmem:[#allocation5 + $0x68] sm:$0xff]
    %v177 = vld [vmem:[#allocation5 + $0x70] sm:$0xff]
    %v178 = vld [vmem:[#allocation5 + $0x78] sm:$0xff]
    %v179 = vld [vmem:[%s4] sm:$0x1]
    %v181 = vlaneseq
    %v182 = vshrl.u32 %v181, 7
    %v183 = vsub.s32 0, %v182
    %v184 = vrot.slane %v179, %v183
    %186 = vmatprep.subr.mxu0 0.0
    %187 = vmatpush1.msra.mxu0 %v178
    %188 = vmatprep.subr.mxu0 0.0
    %189 = vmatpush1.msra.mxu0 %v177
    %190 = vmatprep.subr.mxu0 0.0
    %191 = vmatpush1.msra.mxu0 %v176
    %192 = vmatprep.subr.mxu0 0.0
    %193 = vmatpush1.msra.mxu0 %v175
    %194 = vmatprep.subr.mxu0 0.0
    %195 = vmatpush1.msra.mxu0 %v174
    %196 = vmatprep.subr.mxu0 0.0
    %197 = vmatpush1.msra.mxu0 %v173
    %198 = vmatprep.subr.mxu0 0.0
    %199 = vmatpush1.msra.mxu0 %v172
    %200 = vmatprep.subr.mxu0 0.0
    %201 = vmatpush1.msra.mxu0 %v171
    %202 = vmatprep.subr.mxu0 0.0
    %203 = vmatpush1.msra.mxu0 %v170
    %204 = vmatprep.subr.mxu0 0.0
    %205 = vmatpush1.msra.mxu0 %v169
    %206 = vmatprep.subr.mxu0 0.0
    %207 = vmatpush1.msra.mxu0 %v168
    %208 = vmatprep.subr.mxu0 0.0
    %209 = vmatpush1.msra.mxu0 %v167
    %210 = vmatprep.subr.mxu0 0.0
    %211 = vmatpush1.msra.mxu0 %v166
    %212 = vmatprep.subr.mxu0 0.0
    %213 = vmatpush1.msra.mxu0 %v165
    %214 = vmatprep.subr.mxu0 0.0
    %215 = vmatpush1.msra.mxu0 %v164
    %216 = vmatprep.subr.mxu0 0.0
    %217 = vmatpush1.msra.mxu0 %v163
    %218 = vmatprep.subr.mxu0 0.0
    %219 = vmatpush2.msra.mxu0 0.0
    %220 = vmatprep.subr.mxu0 0.0
    %221 = vmatpush2.msra.mxu0 0.0
    %222 = vmatprep.subr.mxu0 0.0
    %223 = vmatpush2.msra.mxu0 0.0
    %224 = vmatprep.subr.mxu0 0.0
    %225 = vmatpush2.msra.mxu0 0.0
    %226 = vmatprep.subr.mxu0 0.0
    %227 = vmatpush2.msra.mxu0 0.0
    %228 = vmatprep.subr.mxu0 0.0
    %229 = vmatpush2.msra.mxu0 0.0
    %230 = vmatprep.subr.mxu0 0.0
    %231 = vmatpush2.msra.mxu0 0.0
    %232 = vmatprep.subr.mxu0 0.0
    %233 = vmatpush2.msra.mxu0 0.0
    %234 = vmatprep.subr.mxu0 0.0
    %235 = vmatpush2.msra.mxu0 0.0
    %236 = vmatprep.subr.mxu0 0.0
    %237 = vmatpush2.msra.mxu0 0.0
    %238 = vmatprep.subr.mxu0 0.0
    %239 = vmatpush2.msra.mxu0 0.0
    %240 = vmatprep.subr.mxu0 0.0
    %241 = vmatpush2.msra.mxu0 0.0
    %242 = vmatprep.subr.mxu0 0.0
    %243 = vmatpush2.msra.mxu0 0.0
    %244 = vmatprep.subr.mxu0 0.0
    %245 = vmatpush2.msra.mxu0 0.0
    %246 = vmatprep.subr.mxu0 0.0
    %247 = vmatpush2.msra.mxu0 0.0
    %248 = vmatprep.subr.mxu0 0.0
    %249 = vmatpush2.msra.mxu0 0.0
    %250 = vmatprep.mubr.f32.mxu0 0.0
    %251 = vmatmul.mubr.f32.gmra.mxu0 %v162
    %v252 = vpop.f32.mrf.mxu0
    %v253 = vadd.f32 %v184, %v252
    %v254 = vpop.f32.mrf.mxu0
    %255 = vdwg.mxu0
    %v256 = vmax.f32 %v253, 0.0
    %v257 = vld [vmem:[#allocation7] sm:$0xff]
    %v258 = vld [vmem:[#allocation7 + $0x8] sm:$0xff]
    %v259 = vld [vmem:[#allocation7 + $0x10] sm:$0xff]
    %v260 = vld [vmem:[#allocation7 + $0x18] sm:$0xff]
    %v261 = vld [vmem:[#allocation7 + $0x20] sm:$0xff]
    %v262 = vld [vmem:[#allocation7 + $0x28] sm:$0xff]
    %v263 = vld [vmem:[#allocation7 + $0x30] sm:$0xff]
    %v264 = vld [vmem:[#allocation7 + $0x38] sm:$0xff]
    %v265 = vld [vmem:[#allocation7 + $0x40] sm:$0xff]
    %v266 = vld [vmem:[#allocation7 + $0x48] sm:$0xff]
    %v267 = vld [vmem:[#allocation7 + $0x50] sm:$0xff]
    %v268 = vld [vmem:[#allocation7 + $0x58] sm:$0xff]
    %v269 = vld [vmem:[#allocation7 + $0x60] sm:$0xff]
    %v270 = vld [vmem:[#allocation7 + $0x68] sm:$0xff]
    %v271 = vld [vmem:[#allocation7 + $0x70] sm:$0xff]
    %v272 = vld [vmem:[#allocation7 + $0x78] sm:$0xff]
    %v273 = vld [vmem:[%s6] sm:$0x1]
    %v275 = vlaneseq
    %v276 = vshrl.u32 %v275, 7
    %v277 = vsub.s32 0, %v276
    %v278 = vrot.slane %v273, %v277
    %280 = vmatprep.subr.mxu0 0.0
    %281 = vmatpush1.msra.mxu0 %v272
    %282 = vmatprep.subr.mxu0 0.0
    %283 = vmatpush1.msra.mxu0 %v271
    %284 = vmatprep.subr.mxu0 0.0
    %285 = vmatpush1.msra.mxu0 %v270
    %286 = vmatprep.subr.mxu0 0.0
    %287 = vmatpush1.msra.mxu0 %v269
    %288 = vmatprep.subr.mxu0 0.0
    %289 = vmatpush1.msra.mxu0 %v268
    %290 = vmatprep.subr.mxu0 0.0
    %291 = vmatpush1.msra.mxu0 %v267
    %292 = vmatprep.subr.mxu0 0.0
    %293 = vmatpush1.msra.mxu0 %v266
    %294 = vmatprep.subr.mxu0 0.0
    %295 = vmatpush1.msra.mxu0 %v265
    %296 = vmatprep.subr.mxu0 0.0
    %297 = vmatpush1.msra.mxu0 %v264
    %298 = vmatprep.subr.mxu0 0.0
    %299 = vmatpush1.msra.mxu0 %v263
    %300 = vmatprep.subr.mxu0 0.0
    %301 = vmatpush1.msra.mxu0 %v262
    %302 = vmatprep.subr.mxu0 0.0
    %303 = vmatpush1.msra.mxu0 %v261
    %304 = vmatprep.subr.mxu0 0.0
    %305 = vmatpush1.msra.mxu0 %v260
    %306 = vmatprep.subr.mxu0 0.0
    %307 = vmatpush1.msra.mxu0 %v259
    %308 = vmatprep.subr.mxu0 0.0
    %309 = vmatpush1.msra.mxu0 %v258
    %310 = vmatprep.subr.mxu0 0.0
    %311 = vmatpush1.msra.mxu0 %v257
    %312 = vmatprep.subr.mxu0 0.0
    %313 = vmatpush2.msra.mxu0 0.0
    %314 = vmatprep.subr.mxu0 0.0
    %315 = vmatpush2.msra.mxu0 0.0
    %316 = vmatprep.subr.mxu0 0.0
    %317 = vmatpush2.msra.mxu0 0.0
    %318 = vmatprep.subr.mxu0 0.0
    %319 = vmatpush2.msra.mxu0 0.0
    %320 = vmatprep.subr.mxu0 0.0
    %321 = vmatpush2.msra.mxu0 0.0
    %322 = vmatprep.subr.mxu0 0.0
    %323 = vmatpush2.msra.mxu0 0.0
    %324 = vmatprep.subr.mxu0 0.0
    %325 = vmatpush2.msra.mxu0 0.0
    %326 = vmatprep.subr.mxu0 0.0
    %327 = vmatpush2.msra.mxu0 0.0
    %328 = vmatprep.subr.mxu0 0.0
    %329 = vmatpush2.msra.mxu0 0.0
    %330 = vmatprep.subr.mxu0 0.0
    %331 = vmatpush2.msra.mxu0 0.0
    %332 = vmatprep.subr.mxu0 0.0
    %333 = vmatpush2.msra.mxu0 0.0
    %334 = vmatprep.subr.mxu0 0.0
    %335 = vmatpush2.msra.mxu0 0.0
    %336 = vmatprep.subr.mxu0 0.0
    %337 = vmatpush2.msra.mxu0 0.0
    %338 = vmatprep.subr.mxu0 0.0
    %339 = vmatpush2.msra.mxu0 0.0
    %340 = vmatprep.subr.mxu0 0.0
    %341 = vmatpush2.msra.mxu0 0.0
    %342 = vmatprep.subr.mxu0 0.0
    %343 = vmatpush2.msra.mxu0 0.0
    %344 = vmatprep.mubr.f32.mxu0 0.0
    %345 = vmatmul.mubr.f32.gmra.mxu0 %v256
    %v346 = vpop.f32.mrf.mxu0
    %v347 = vadd.f32 %v278, %v346
    %v348 = vpop.f32.mrf.mxu0
    %349 = vdwg.mxu0
    %350 = vst [vmem:[#allocation8] sm:$0xff] %v347
    // Predicated region
    $region42: #{encoder_decoder_forward.1} parent=1 // pred_check
      _
    $region43: #{encoder_decoder_forward.1} parent=1 // pred_check_branch
      %352 = sbr.rel (0) target = $region45
    $region44: #{encoder_decoder_forward.1} parent=1 // pred_region
      %s354 = ssub.s32 128, 128
      %355 = vsyncadd [#allocation4], %s354
      %s357 = sshll.u32 [#allocation8], 4
      %s358 = int_to_ptr.vmem [resolvable:$true] %s357
      %360 = dma.vmem_to_hbm [thread:$0]  %s358, 128, %s7, [#allocation4]
    $region45: #{encoder_decoder_forward.1} parent=1 // pred_fallthru
      _
    // Predicated region
    $region46: #{encoder_decoder_forward.1} parent=1 // pred_check
      _
    $region47: #{encoder_decoder_forward.1} parent=1 // pred_check_branch
      %362 = sbr.rel (0) target = $region49
    $region48: #{encoder_decoder_forward.1} parent=1 // pred_region
      %363 = dma.done [#allocation4], 128
    $region49: #{encoder_decoder_forward.1} parent=1 // pred_fallthru
      _
    %364 = vsyncpa [#allocation3], 1
    %365 = vsyncpa [#allocation6], 1
    %366 = vsyncpa [#allocation4], 1

</llo_original>
